<compile_context>
chip_gen: v6e
topology: v6e:2x2x1
jax: 0.10.0
libtpu: 0.0.40
codegen_flags: <defaults>
</compile_context>

<pallas_src>
import functools

import jax
import jax.numpy as jnp
from jax.experimental import pallas as pl
from jax.experimental.pallas import tpu as pltpu


def _mse_xent_kernel(pred_ref, tgt_ref, out_ref, acc_sq_ref, acc_pt_ref, acc_kl_ref):
    j = pl.program_id(1)                       # row-tile index within this split (reduction axis)

    @pl.when(j == 0)
    def _init():
        acc_sq_ref[...] = jnp.zeros_like(acc_sq_ref)   # (1, C)  column sums of pred^2
        acc_pt_ref[...] = jnp.zeros_like(acc_pt_ref)   # (1, 1)  sum of pred[row, target[row]]
        acc_kl_ref[...] = jnp.zeros_like(acc_kl_ref)   # (1, 1)  sum of -log(p_target)

    pred = pred_ref[...].astype(jnp.float32)   # native-dtype DMA (bf16/f32), f32 compute
    tgt = tgt_ref[...]                         # (tile_b, 1) int32, -1 marks padded rows

    # Probability at the target column of each row (lane-broadcast compare, no scatter/gather).
    col = jax.lax.broadcasted_iota(jnp.int32, pred.shape, 1)
    sel = jnp.where(col == tgt, pred, 0.0)
    p_t = jnp.sum(sel, axis=1, keepdims=True)          # (tile_b, 1)

    valid = tgt >= 0                                    # padded rows excluded from the log term

    # Axis-0 (sublane) reductions -> mostly VPU vreg adds into resident VMEM accumulators;
    # no per-step tile->scalar reduce and no SMEM scalar store/load chain.
    acc_sq_ref[...] += jnp.sum(pred * pred, axis=0, keepdims=True)          # (1, C)
    acc_pt_ref[...] += jnp.sum(p_t, axis=0, keepdims=True)                  # (1, 1)
    acc_kl_ref[...] += jnp.sum(jnp.where(valid, -jnp.log(p_t + 1e-20), 0.0),
                               axis=0, keepdims=True)                       # (1, 1)

    @pl.when(j == pl.num_programs(1) - 1)
    def _finalize():
        # Single cross-lane reduce per split; partials are normalized in the wrapper.
        mse_part = jnp.sum(acc_sq_ref[...]) - 2.0 * jnp.sum(acc_pt_ref[...])
        kl_part = jnp.sum(acc_kl_ref[...])
        # Pack the two scalars into a lane-dense (1, 8, 128) output block:
        # sublane 0 carries the MSE partial, sublane 1 (and the rest) the KL partial.
        sub = jax.lax.broadcasted_iota(jnp.int32, out_ref.shape, 1)
        out_ref[...] = jnp.where(sub == 0, mse_part, kl_part).astype(out_ref.dtype)


def _vmem_limit_bytes():
    """Generation-aware VMEM request (≈48 MiB on v7x, ≈96 MiB on v5e/v6e)."""
    try:
        vmem_cap = int(pltpu.get_tpu_info().vmem_capacity_bytes)
    except Exception:
        vmem_cap = 64 * 2**20                  # conservative fallback (v7x physical VMEM)
    return max(16 * 2**20, min(int(0.75 * vmem_cap), 100 * 2**20))


def _choose_tile_b(batch, num_cols, itemsize, vmem_limit):
    # VMEM bytes one pipeline buffer-set needs per row:
    #   pred row : lanes padded up to a multiple of 128
    #   tgt row  : a (tile_b, 1) i32 block pads lanes to 128 -> 512 B/row in VMEM
    cols_pad = ((num_cols + 127) // 128) * 128
    per_row = cols_pad * itemsize + 512
    budget = vmem_limit // 4                   # x2 double-buffering, plus headroom for scratch
    tb = budget // per_row
    tb = max(8, min(32768, (int(tb) // 8) * 8))
    b_pad = ((batch + 7) // 8) * 8
    return min(tb, b_pad)


def mse_cross_entropy_loss(pred, target, mse_coeff: float = 0.5, kldiv_coeff: float = 1.0,
                           tile_b: int | None = None):
    """JAX/Pallas equivalent of MSECrossEntropyLoss.forward(pred, target)."""
    assert pred.ndim == 2, "pred should be 2D"
    B, C = pred.shape
    itemsize = jnp.dtype(pred.dtype).itemsize
    tgt2d = target.astype(jnp.int32).reshape(B, 1)

    vmem_limit = _vmem_limit_bytes()
    if tile_b is None:
        tile_b = _choose_tile_b(B, C, itemsize, vmem_limit)
    tile_b = max(8, (int(tile_b) // 8) * 8)

    num_tiles = pl.cdiv(B, tile_b)
    num_splits = 2 if num_tiles >= 2 else 1          # rows split across TCs on multi-core chips
    tiles_per_split = pl.cdiv(num_tiles, num_splits)
    b_pad = num_splits * tiles_per_split * tile_b
    if b_pad != B:
        # Zero rows contribute nothing to the MSE partials; target = -1 masks the KL log.
        pred = jnp.pad(pred, ((0, b_pad - B), (0, 0)))
        tgt2d = jnp.pad(tgt2d, ((0, b_pad - B), (0, 0)), constant_values=-1)

    row_map = lambda i, j: (i * tiles_per_split + j, 0)

    out = pl.pallas_call(
        _mse_xent_kernel,
        out_shape=jax.ShapeDtypeStruct((num_splits, 8, 128), jnp.float32),
        grid=(num_splits, tiles_per_split),
        in_specs=[
            pl.BlockSpec((tile_b, C), row_map),       # pred tile, native dtype, auto-pipelined
            pl.BlockSpec((tile_b, 1), row_map),       # target column (lane-broadcast compare)
        ],
        out_specs=pl.BlockSpec((1, 8, 128), lambda i, j: (i, 0, 0)),   # per-split partials
        scratch_shapes=[
            pltpu.VMEM((1, C), jnp.float32),          # column sums of pred^2
            pltpu.VMEM((1, 1), jnp.float32),          # sum of p_target
            pltpu.VMEM((1, 1), jnp.float32),          # sum of -log(p_target)
        ],
        compiler_params=pltpu.CompilerParams(
            dimension_semantics=("parallel", "arbitrary"),
            vmem_limit_bytes=vmem_limit,
        ),
        cost_estimate=pl.CostEstimate(
            flops=6 * B * C,
            transcendentals=B,
            bytes_accessed=B * C * itemsize + B * 4 + num_splits * 8 * 128 * 4,
        ),
    )(pred, tgt2d)

    # Tiny scalar epilogue on the per-split partials (trace-time constants for normalization).
    mse_sum = jnp.sum(out[:, 0, 0]) + jnp.float32(B)   # + B from sum(one_hot^2)
    kl_sum = jnp.sum(out[:, 1, 0])
    inv_n = 1.0 / float(B * C)
    inv_norm = 1.0 / (abs(kldiv_coeff) + abs(mse_coeff))
    loss = (mse_sum * inv_n) * float(mse_coeff) + (kl_sum * inv_n) * float(kldiv_coeff)
    return loss * inv_norm


def _reference(pred, target, mse_coeff=0.5, kldiv_coeff=1.0):
    B, C = pred.shape
    one_hot = jax.nn.one_hot(target, C, dtype=pred.dtype)
    loss = jnp.mean((pred - one_hot) ** 2) * mse_coeff
    loss = loss + jnp.mean(one_hot * jnp.log((one_hot + 1e-20) / (pred + 1e-20))) * kldiv_coeff
    return loss / (abs(kldiv_coeff) + abs(mse_coeff))


if __name__ == "__main__":
    key = jax.random.PRNGKey(0)
    k1, k2, k3, k4 = jax.random.split(key, 4)

    # Test 1: small aligned shape, single tile / single split.
    B, C = 8, 128
    pred1 = jax.nn.softmax(jax.random.normal(k1, (B, C), dtype=jnp.float32), axis=-1)
    tgt1 = jax.random.randint(k2, (B,), 0, C, dtype=jnp.int32)
    loss1 = jax.block_until_ready(mse_cross_entropy_loss(pred1, tgt1, 0.5, 1.0))
    ref1 = _reference(pred1, tgt1, 0.5, 1.0)
    assert jnp.allclose(loss1, ref1, rtol=1e-5, atol=1e-6), (loss1, ref1)

    # Test 2: batch not divisible by the tile -> 2-split grid + padding / target masking path.
    B2, C2 = 40, 128
    pred2 = jax.nn.softmax(jax.random.normal(k3, (B2, C2), dtype=jnp.float32), axis=-1)
    tgt2 = jax.random.randint(k4, (B2,), 0, C2, dtype=jnp.int32)
    loss2 = jax.block_until_ready(mse_cross_entropy_loss(pred2, tgt2, 0.5, 1.0, tile_b=16))
    ref2 = _reference(pred2, tgt2, 0.5, 1.0)
    assert jnp.allclose(loss2, ref2, rtol=1e-5, atol=1e-6), (loss2, ref2)

    print("KERNEL_OK")
</pallas_src>

<mosaic_0001>
module attributes {stable_mosaic.version = 11 : i64} {
  func.func @_mse_xent_kernel(%arg0: i32, %arg1: i32, %arg2: memref<8x128xf32, #tpu.memory_space<vmem>>, %arg3: memref<8x1xi32, #tpu.memory_space<vmem>>, %arg4: memref<1x8x128xf32, #tpu.memory_space<vmem>>, %arg5: memref<1x128xf32, #tpu.memory_space<vmem>>, %arg6: memref<1x1xf32, #tpu.memory_space<vmem>>, %arg7: memref<1x1xf32, #tpu.memory_space<vmem>>) attributes {dimension_semantics = [#tpu.dimension_semantics<parallel>, #tpu.dimension_semantics<arbitrary>], iteration_bounds = array<i64: 1, 1>, scalar_prefetch = 0 : i64, scratch_operands = 3 : i64, tpu.core_type = #tpu.core_type<tc>, window_params = [{transform_indices = @transform_0, window_bounds = array<i64: 8, 128>}, {transform_indices = @transform_1, window_bounds = array<i64: 8, 1>}, {transform_indices = @transform_2, window_bounds = array<i64: 1, 8, 128>}]} {
    %c0_i32 = arith.constant 0 : i32
    %0 = arith.cmpi eq, %arg1, %c0_i32 : i32
    %1 = arith.extui %0 : i1 to i32
    %c0_i32_0 = arith.constant 0 : i32
    %2 = arith.cmpi ne, %1, %c0_i32_0 : i32
    scf.if %2 {
      %cst_26 = arith.constant 0.000000e+00 : f32
      %40 = vector.broadcast %cst_26 : f32 to vector<1x128xf32>
      %c0_27 = arith.constant 0 : index
      %c0_28 = arith.constant 0 : index
      %41 = vector.load %arg5[%c0_27, %c0_28] : memref<1x128xf32, #tpu.memory_space<vmem>>, vector<1x128xf32>
      tpu.vector_store %arg5[%c0_27, %c0_28], %40 {strides = array<i32>} : memref<1x128xf32, #tpu.memory_space<vmem>>, vector<1x128xf32>,
      %cst_29 = arith.constant 0.000000e+00 : f32
      %42 = vector.broadcast %cst_29 : f32 to vector<1x1xf32>
      %c0_30 = arith.constant 0 : index
      %c0_31 = arith.constant 0 : index
      %43 = vector.load %arg6[%c0_30, %c0_31] : memref<1x1xf32, #tpu.memory_space<vmem>>, vector<1x1xf32>
      tpu.vector_store %arg6[%c0_30, %c0_31], %42 {strides = array<i32>} : memref<1x1xf32, #tpu.memory_space<vmem>>, vector<1x1xf32>,
      %cst_32 = arith.constant 0.000000e+00 : f32
      %44 = vector.broadcast %cst_32 : f32 to vector<1x1xf32>
      %c0_33 = arith.constant 0 : index
      %c0_34 = arith.constant 0 : index
      %45 = vector.load %arg7[%c0_33, %c0_34] : memref<1x1xf32, #tpu.memory_space<vmem>>, vector<1x1xf32>
      tpu.vector_store %arg7[%c0_33, %c0_34], %44 {strides = array<i32>} : memref<1x1xf32, #tpu.memory_space<vmem>>, vector<1x1xf32>,
    } else {
    }
    %c0 = arith.constant 0 : index
    %c0_1 = arith.constant 0 : index
    %3 = vector.load %arg2[%c0, %c0_1] : memref<8x128xf32, #tpu.memory_space<vmem>>, vector<8x128xf32>
    %c0_2 = arith.constant 0 : index
    %c0_3 = arith.constant 0 : index
    %4 = vector.load %arg3[%c0_2, %c0_3] : memref<8x1xi32, #tpu.memory_space<vmem>>, vector<8x1xi32>
    %5 = tpu.iota {dimensions = array<i32: 1>} : vector<8x128xi32>
    %6 = vector.broadcast %4 : vector<8x1xi32> to vector<8x128xi32>
    %7 = arith.cmpi eq, %5, %6 : vector<8x128xi32>
    %cst = arith.constant 0.000000e+00 : f32
    %8 = vector.broadcast %cst : f32 to vector<8x128xf32>
    %9 = arith.select %7, %3, %8 : vector<8x128xi1>, vector<8x128xf32>
    %cst_4 = arith.constant dense<0.000000e+00> : vector<8xf32>
    %10 = vector.multi_reduction <add>, %9, %cst_4 [1] : vector<8x128xf32> to vector<8xf32>
    %11 = vector.shape_cast %10 : vector<8xf32> to vector<8x1xf32>
    %c0_i32_5 = arith.constant 0 : i32
    %12 = vector.broadcast %c0_i32_5 : i32 to vector<8x1xi32>
    %13 = arith.cmpi sge, %4, %12 : vector<8x1xi32>
    %c0_6 = arith.constant 0 : index
    %c0_7 = arith.constant 0 : index
    %14 = vector.load %arg5[%c0_6, %c0_7] : memref<1x128xf32, #tpu.memory_space<vmem>>, vector<1x128xf32>
    %15 = arith.mulf %3, %3 : vector<8x128xf32>
    %cst_8 = arith.constant dense<0.000000e+00> : vector<128xf32>
    %16 = vector.multi_reduction <add>, %15, %cst_8 [0] : vector<8x128xf32> to vector<128xf32>
    %17 = vector.shape_cast %16 : vector<128xf32> to vector<1x128xf32>
    %18 = arith.addf %14, %17 : vector<1x128xf32>
    %c0_9 = arith.constant 0 : index
    %c0_10 = arith.constant 0 : index
    %19 = vector.load %arg5[%c0_9, %c0_10] : memref<1x128xf32, #tpu.memory_space<vmem>>, vector<1x128xf32>
    tpu.vector_store %arg5[%c0_9, %c0_10], %18 {strides = array<i32>} : memref<1x128xf32, #tpu.memory_space<vmem>>, vector<1x128xf32>,
    %c0_11 = arith.constant 0 : index
    %c0_12 = arith.constant 0 : index
    %20 = vector.load %arg6[%c0_11, %c0_12] : memref<1x1xf32, #tpu.memory_space<vmem>>, vector<1x1xf32>
    %cst_13 = arith.constant dense<0.000000e+00> : vector<1xf32>
    %21 = vector.multi_reduction <add>, %11, %cst_13 [0] : vector<8x1xf32> to vector<1xf32>
    %22 = vector.shape_cast %21 : vector<1xf32> to vector<1x1xf32>
    %23 = arith.addf %20, %22 : vector<1x1xf32>
    %c0_14 = arith.constant 0 : index
    %c0_15 = arith.constant 0 : index
    %24 = vector.load %arg6[%c0_14, %c0_15] : memref<1x1xf32, #tpu.memory_space<vmem>>, vector<1x1xf32>
    tpu.vector_store %arg6[%c0_14, %c0_15], %23 {strides = array<i32>} : memref<1x1xf32, #tpu.memory_space<vmem>>, vector<1x1xf32>,
    %c0_16 = arith.constant 0 : index
    %c0_17 = arith.constant 0 : index
    %25 = vector.load %arg7[%c0_16, %c0_17] : memref<1x1xf32, #tpu.memory_space<vmem>>, vector<1x1xf32>
    %cst_18 = arith.constant 9.99999968E-21 : f32
    %26 = vector.broadcast %cst_18 : f32 to vector<8x1xf32>
    %27 = arith.addf %11, %26 : vector<8x1xf32>
    %28 = math.log %27 : vector<8x1xf32>
    %cst_19 = arith.constant 0.000000e+00 : f32
    %29 = vector.broadcast %cst_19 : f32 to vector<8x1xf32>
    %30 = arith.subf %29, %28 : vector<8x1xf32>
    %cst_20 = arith.constant 0.000000e+00 : f32
    %31 = vector.broadcast %cst_20 : f32 to vector<8x1xf32>
    %32 = arith.select %13, %30, %31 : vector<8x1xi1>, vector<8x1xf32>
    %cst_21 = arith.constant dense<0.000000e+00> : vector<1xf32>
    %33 = vector.multi_reduction <add>, %32, %cst_21 [0] : vector<8x1xf32> to vector<1xf32>
    %34 = vector.shape_cast %33 : vector<1xf32> to vector<1x1xf32>
    %35 = arith.addf %25, %34 : vector<1x1xf32>
    %c0_22 = arith.constant 0 : index
    %c0_23 = arith.constant 0 : index
    %36 = vector.load %arg7[%c0_22, %c0_23] : memref<1x1xf32, #tpu.memory_space<vmem>>, vector<1x1xf32>
    tpu.vector_store %arg7[%c0_22, %c0_23], %35 {strides = array<i32>} : memref<1x1xf32, #tpu.memory_space<vmem>>, vector<1x1xf32>,
    %c0_i32_24 = arith.constant 0 : i32
    %37 = arith.cmpi eq, %arg1, %c0_i32_24 : i32
    %38 = arith.extui %37 : i1 to i32
    %c0_i32_25 = arith.constant 0 : i32
    %39 = arith.cmpi ne, %38, %c0_i32_25 : i32
    scf.if %39 {
      %c0_26 = arith.constant 0 : index
      %c0_27 = arith.constant 0 : index
      %40 = vector.load %arg5[%c0_26, %c0_27] : memref<1x128xf32, #tpu.memory_space<vmem>>, vector<1x128xf32>
      %41 = vector.shape_cast %40 : vector<1x128xf32> to vector<1x1x128xf32>
      %cst_28 = arith.constant dense<0.000000e+00> : vector<1xf32>
      %42 = vector.multi_reduction <add>, %41, %cst_28 [1, 2] : vector<1x1x128xf32> to vector<1xf32>
      %43 = vector.shape_cast %42 : vector<1xf32> to vector<1x1x1xf32>
      %44 = vector.extract %43[0, 0, 0] : f32 from vector<1x1x1xf32>
      %c0_29 = arith.constant 0 : index
      %c0_30 = arith.constant 0 : index
      %45 = vector.load %arg6[%c0_29, %c0_30] : memref<1x1xf32, #tpu.memory_space<vmem>>, vector<1x1xf32>
      %46 = vector.shape_cast %45 : vector<1x1xf32> to vector<1x1x1xf32>
      %cst_31 = arith.constant dense<0.000000e+00> : vector<1xf32>
      %47 = vector.multi_reduction <add>, %46, %cst_31 [1, 2] : vector<1x1x1xf32> to vector<1xf32>
      %48 = vector.shape_cast %47 : vector<1xf32> to vector<1x1x1xf32>
      %49 = vector.extract %48[0, 0, 0] : f32 from vector<1x1x1xf32>
      %cst_32 = arith.constant 2.000000e+00 : f32
      %50 = arith.mulf %cst_32, %49 : f32
      %51 = arith.subf %44, %50 : f32
      %c0_33 = arith.constant 0 : index
      %c0_34 = arith.constant 0 : index
      %52 = vector.load %arg7[%c0_33, %c0_34] : memref<1x1xf32, #tpu.memory_space<vmem>>, vector<1x1xf32>
      %53 = vector.shape_cast %52 : vector<1x1xf32> to vector<1x1x1xf32>
      %cst_35 = arith.constant dense<0.000000e+00> : vector<1xf32>
      %54 = vector.multi_reduction <add>, %53, %cst_35 [1, 2] : vector<1x1x1xf32> to vector<1xf32>
      %55 = vector.shape_cast %54 : vector<1xf32> to vector<1x1x1xf32>
      %56 = vector.extract %55[0, 0, 0] : f32 from vector<1x1x1xf32>
      %57 = tpu.iota {dimensions = array<i32: 1>} : vector<1x8x128xi32>
      %c0_i32_36 = arith.constant 0 : i32
      %58 = vector.broadcast %c0_i32_36 : i32 to vector<1x8x128xi32>
      %59 = arith.cmpi eq, %57, %58 : vector<1x8x128xi32>
      %60 = vector.broadcast %51 : f32 to vector<1x8x128xf32>
      %61 = vector.broadcast %56 : f32 to vector<1x8x128xf32>
      %62 = arith.select %59, %60, %61 : vector<1x8x128xi1>, vector<1x8x128xf32>
      %c0_37 = arith.constant 0 : index
      %c0_38 = arith.constant 0 : index
      %c0_39 = arith.constant 0 : index
      %63 = vector.load %arg4[%c0_37, %c0_38, %c0_39] : memref<1x8x128xf32, #tpu.memory_space<vmem>>, vector<1x8x128xf32>
      tpu.vector_store %arg4[%c0_37, %c0_38, %c0_39], %62 {strides = array<i32>} : memref<1x8x128xf32, #tpu.memory_space<vmem>>, vector<1x8x128xf32>,
    } else {
    }
    return
  }
  func.func @transform_0(%arg0: i32, %arg1: i32) -> (i32, i32) {
    %c1_i32 = arith.constant 1 : i32
    %0 = arith.muli %arg0, %c1_i32 : i32
    %1 = arith.addi %0, %arg1 : i32
    %c0_i32 = arith.constant 0 : i32
    %c0_i32_0 = arith.constant 0 : i32
    return %1, %c0_i32 : i32, i32
  }
  func.func @transform_1(%arg0: i32, %arg1: i32) -> (i32, i32) {
    %c1_i32 = arith.constant 1 : i32
    %0 = arith.muli %arg0, %c1_i32 : i32
    %1 = arith.addi %0, %arg1 : i32
    %c0_i32 = arith.constant 0 : i32
    %c0_i32_0 = arith.constant 0 : i32
    return %1, %c0_i32 : i32, i32
  }
  func.func @transform_2(%arg0: i32, %arg1: i32) -> (i32, i32, i32) {
    %c0_i32 = arith.constant 0 : i32
    %c0_i32_0 = arith.constant 0 : i32
    %c0_i32_1 = arith.constant 0 : i32
    return %arg0, %c0_i32, %c0_i32_0 : i32, i32, i32
  }
}

</mosaic_0001>

<llo_original>
// kernel: tpu_custom_call.1
$region0: #{tpu_custom_call.1}
  #allocation0 [shape = 'u32[]', space=smem, size = 0x4, offset = 0x4, fixed_abs, tag = 'smem constant byte address 0x4 - core index']
  #allocation1 [shape = 'u32[144,128]{1,0:T(1,128)}', space=vmem, size = 0x12000, scoped, tag = 'internal scratch']
  #allocation2 [shape = 'f32[1,128]{1,0:T(1,128)}', space=vmem, size = 0x200, scoped, tag = 'scratch operand']
  #allocation3 [shape = 'f32[1,1]{1,0:T(1,128)}', space=vmem, size = 0x200, scoped, tag = 'scratch operand']
  #allocation4 [shape = 'f32[1,1]{1,0:T(1,128)}', space=vmem, size = 0x200, scoped, tag = 'scratch operand']
  %s0 = inlined_call_operand.vmem [shape: f32[8,128], index: 0, kind: input, shape index: {}]
  %s1 = inlined_call_operand.vmem [shape: s32[8,1], index: 1, kind: input, shape index: {}]
  %s2 = inlined_call_operand.hbm [shape: f32[1,8,128], index: 2, kind: output, shape index: {}]
  %s3 = sld [smem:[#allocation0]]
  $region26: #{tpu_custom_call.1} parent=0
    _
  %s5 = ssub.s32 1, %s3
  %s6 = scalar_select 0, %s5, %s3
  $region1: #{tpu_custom_call.1} parent=0
    #allocation5 [shape = 'u8[4096]{0}', space=vmem, size = 0x1000, scoped, tag = 'output window, operand 0, single buffered']
    #allocation6 [shape = 's32[1]{0}', space=sflag, size = 0x4, scoped, tag = 'scoped memory for tpu_custom_call.1']
    %7 = vsyncpa [#allocation6], 0
    // Predicated region
    $region2: #{tpu_custom_call.1} parent=1 // pred_check
      _
    $region3: #{tpu_custom_call.1} parent=1 // pred_check_branch
      %9 = sbr.rel (0) target = $region5
    $region4: #{tpu_custom_call.1} parent=1 // pred_region
      %s10 = sadd.s32 0, 0
      %p11 = scmp.lt.s32.totalorder %s10, 0
      %s12 = scalar_select %p11, %s10, 0
      %s13 = smul.addr %s12, 8
      %s14 = scalar_lea.vmem %s0, %s13
      %s15 = sadd.s32 0, 0
    $region5: #{tpu_custom_call.1} parent=1 // pred_fallthru
      _
    // Predicated region
    $region6: #{tpu_custom_call.1} parent=1 // pred_check
      _
    $region7: #{tpu_custom_call.1} parent=1 // pred_check_branch
      %17 = sbr.rel (0) target = $region9
    $region8: #{tpu_custom_call.1} parent=1 // pred_region
      %s18 = sadd.s32 0, 0
      %p19 = scmp.lt.s32.totalorder %s18, 0
      %s20 = scalar_select %p19, %s18, 0
      %s21 = smul.addr %s20, 8
      %s22 = scalar_lea.vmem %s1, %s21
      %s23 = sadd.s32 0, 0
    $region9: #{tpu_custom_call.1} parent=1 // pred_fallthru
      _
    %s24 = sadd.s32 0, 0
    %p25 = scmp.lt.s32.totalorder %s24, 0
    %s26 = scalar_select %p25, %s24, 0
    %s27 = smul.addr %s26, 8
    %s28 = scalar_lea.vmem %s0, %s27
    %s29 = sadd.s32 0, 0
    %p30 = scmp.lt.s32.totalorder %s29, 0
    %s31 = scalar_select %p30, %s29, 0
    %s32 = smul.addr %s31, 8
    %s33 = scalar_lea.vmem %s1, %s32
    %s34 = sadd.s32 0, 0
    %p35 = scmp.lt.s32.totalorder %s34, 0
    %s36 = scalar_select %p35, %s34, 0
    %s37 = smul.addr %s36, 8
    %s38 = scalar_lea.vmem %s0, %s37
    %s39 = sadd.s32 0, 0
    %s40 = sadd.s32 0, 0
    %p41 = scmp.lt.s32.totalorder %s40, 0
    %s42 = scalar_select %p41, %s40, 0
    %s43 = smul.addr %s42, 8
    %s44 = scalar_lea.vmem %s1, %s43
    %s45 = sadd.s32 0, 0
    %p46 = scmp.eq.s32.totalorder 0, 0
    // Predicated region
    $region10: #{tpu_custom_call.1} parent=1 // pred_check
      %p47 = pneg %p46
    $region11: #{tpu_custom_call.1} parent=1 // pred_check_branch
      %49 = sbr.rel (%p47) target = $region13
    $region12: #{tpu_custom_call.1} parent=1 // pred_region
      %50 = vst [vmem:[#allocation2] sm:$0x1] 0.0
      %vm51 = vcmask 0
      %52 = vst.msk [vmem:[#allocation3] sm:$0x1] %vm51, 0.0
      %53 = vst.msk [vmem:[#allocation4] sm:$0x1] %vm51, 0.0
    $region13: #{tpu_custom_call.1} parent=1 // pred_fallthru
      _
    %v54 = vld [vmem:[%s38] sm:$0xff]
    %v55 = vld [vmem:[%s44] sm:$0xff]
    %v56 = vlaneseq
    %v57 = vand.u32 %v56, 127
    %58 = vset.pattern.permute.xlu0 0
    %59 = vperm.xlu0 %58, %v55
    %v60 = vpop.permute.xlu0 %59
    %vm61 = vcmp.eq.s32.totalorder %v57, %v60
    %v62 = vsel %vm61, %v54, 0.0
    %63 = vadd.xlane.f32.xlu0 %v62
    %v64 = vpop.xlane.xlu0 %63
    %vm65 = vcmp.ge.s32.totalorder %v55, 0
    %v66 = vld [vmem:[#allocation2] sm:$0x1]
    %v67 = vmul.f32 %v54, %v54
    %v68 = vrot.slane %v67, 4
    %v69 = vadd.f32 %v67, %v68
    %v70 = vrot.slane %v69, 2
    %v71 = vadd.f32 %v69, %v70
    %v72 = vrot.slane %v71, 1
    %v73 = vadd.f32 %v71, %v72
    %v74 = vadd.f32 %v66, %v73
    %75 = vst [vmem:[#allocation2] sm:$0x1] %v74
    %v76 = vld [vmem:[#allocation3] sm:$0x1]
    %v77 = vrot.slane %v64, 4
    %v78 = vadd.f32 %v64, %v77
    %v79 = vrot.slane %v78, 2
    %v80 = vadd.f32 %v78, %v79
    %v81 = vrot.slane %v80, 1
    %v82 = vadd.f32 %v80, %v81
    %v83 = vadd.f32 %v76, %v82
    %vm84 = vcmask 0
    %85 = vst.msk [vmem:[#allocation3] sm:$0x1] %vm84, %v83
    %v86 = vld [vmem:[#allocation4] sm:$0x1]
    %v87 = vadd.f32 %v64, 1e-20
    %v88 = vlog2.pop %v87
    %v89 = vmul.f32 %v88, 0.6931472
    %v90 = vsub.f32 0.0, %v89
    %v91 = vsel %vm65, %v90, 0.0
    %vm92 = vcmask 7168
    %v93 = vsel %vm92, %v91, 0.0
    %v94 = vrot.slane %v93, 4
    %v95 = vadd.f32 %v93, %v94
    %v96 = vrot.slane %v95, 2
    %v97 = vadd.f32 %v95, %v96
    %v98 = vrot.slane %v97, 1
    %v99 = vadd.f32 %v97, %v98
    %v100 = vadd.f32 %v86, %v99
    %101 = vst.msk [vmem:[#allocation4] sm:$0x1] %vm84, %v100
    // Predicated region
    $region14: #{tpu_custom_call.1} parent=1 // pred_check
      %p102 = pneg %p46
    $region15: #{tpu_custom_call.1} parent=1 // pred_check_branch
      %104 = sbr.rel (%p102) target = $region17
    $region16: #{tpu_custom_call.1} parent=1 // pred_region
      %v105 = vld [vmem:[#allocation2] sm:$0x1]
      %vm106 = vcmask 1040384
      %v107 = vsel %vm106, %v105, 0.0
      %108 = vadd.xlane.f32.xlu0 %v107
      %v109 = vpop.xlane.xlu0 %108
      %v110 = vrot.slane %v109, 4
      %v111 = vadd.f32 %v109, %v110
      %v112 = vrot.slane %v111, 2
      %v113 = vadd.f32 %v111, %v112
      %v114 = vrot.slane %v113, 1
      %v115 = vadd.f32 %v113, %v114
      %s116 = vtos %v115
      %v117 = vld [vmem:[#allocation3] sm:$0x1]
      %v118 = vadd.f32 %v117, 0.0
      %s119 = vtos %v118
      %s120 = smul.f32 %s119, 2.0
      %s121 = ssub.f32 %s116, %s120
      %v122 = vld [vmem:[#allocation4] sm:$0x1]
      %v123 = vadd.f32 %v122, 0.0
      %s124 = vtos %v123
      %v125 = vlaneseq
      %v126 = vshrl.u32 %v125, 7
      %vm127 = vcmp.eq.s32.totalorder %v126, 0
      %v128 = vstv %s121
      %v129 = vstv %s124
      %v130 = vsel %vm127, %v128, %v129
      %131 = vst [vmem:[#allocation5] sm:$0xff] %v130
    $region17: #{tpu_custom_call.1} parent=1 // pred_fallthru
      _
    // Predicated region
    $region18: #{tpu_custom_call.1} parent=1 // pred_check
      _
    $region19: #{tpu_custom_call.1} parent=1 // pred_check_branch
      %133 = sbr.rel (0) target = $region21
    $region20: #{tpu_custom_call.1} parent=1 // pred_region
      %s135 = ssub.s32 128, 128
      %136 = vsyncadd [#allocation6], %s135
      %s138 = sshll.u32 [#allocation5], 4
      %s139 = int_to_ptr.vmem [resolvable:$true] %s138
      %141 = dma.vmem_to_hbm [thread:$0]  %s139, 128, %s2, [#allocation6]
    $region21: #{tpu_custom_call.1} parent=1 // pred_fallthru
      _
    // Predicated region
    $region22: #{tpu_custom_call.1} parent=1 // pred_check
      _
    $region23: #{tpu_custom_call.1} parent=1 // pred_check_branch
      %143 = sbr.rel (0) target = $region25
    $region24: #{tpu_custom_call.1} parent=1 // pred_region
      %144 = dma.done [#allocation6], 128
    $region25: #{tpu_custom_call.1} parent=1 // pred_fallthru
      _
    %145 = vsyncpa [#allocation6], 1

</llo_original>
